<compile_context>
chip_gen: v5e
topology: v5e:2x2
jax: 0.10.0
libtpu: 0.0.40
codegen_flags: <defaults>
</compile_context>

<pallas_src>
import functools

import jax
import jax.numpy as jnp
from jax.experimental import pallas as pl
from jax.experimental.pallas import tpu as pltpu

N_LEVELS = 4
_EPS = 1e-12  # torch.nn.functional.normalize default eps


def _levels_kernel(x_ref, o_ref, *, n_levels: int):
    """x_ref: (TR, TW) native dtype.
    o_ref: (TR, n_levels*TW) [2-D lane-dense path] or (TR, n_levels, TW) [hw-tiled path]."""
    nf = jnp.float32(n_levels)
    # Hoisted multiply: tent_l(x) = max(1 - |x*n - (l+0.5)|, 0) since center_l * n = l + 0.5.
    xn = x_ref[...].astype(jnp.float32) * nf
    scores = [jnp.maximum(1.0 - jnp.abs(xn - jnp.float32(l + 0.5)), 0.0)
              for l in range(n_levels)]
    # L1 denominator (scores >= 0, so the L1 norm is just the sum); init from score 0.
    total = scores[0]
    for s in scores[1:]:
        total = total + s
    t = jnp.maximum(total, jnp.float32(_EPS))
    # EUP reciprocal + one Newton step: rel. error ~2^-24, well inside the 1e-5 check,
    # and the divide work leaves the (binding on v7x) VALU slot.
    inv = pl.reciprocal(t, approx=True)
    inv = inv * (2.0 - t * inv)

    if o_ref.ndim == 2:
        # Lane-dense 2-D output row: level-major blocks of TW lanes.
        tw = x_ref.shape[-1]
        for l, s in enumerate(scores):
            o_ref[:, pl.ds(l * tw, tw)] = (s * inv).astype(o_ref.dtype)
    else:
        # hw-tiled fallback: o_ref is (TR, n_levels, TW); write one level slab at a time.
        for l, s in enumerate(scores):
            o_ref[:, l:l + 1, :] = (s * inv)[:, None, :].astype(o_ref.dtype)


def _pick_row_tile(rows_pad: int, sub: int, tr_cap: int) -> int:
    """Largest multiple-of-`sub` divisor of rows_pad that fits the VMEM cap,
    preferring >= 4 grid steps (pipelining + both v7x TensorCores) when possible."""
    nblk = rows_pad // sub
    cap = max(tr_cap, sub)
    cands = [d * sub for d in range(1, nblk + 1) if nblk % d == 0 and d * sub <= cap]
    if not cands:
        return sub
    big_enough = [t for t in cands if rows_pad // t >= 4]
    return max(big_enough) if big_enough else max(cands)


def linear_levels(x: jax.Array, n_levels: int = N_LEVELS, *,
                  vmem_budget_bytes: int = 28 << 20) -> jax.Array:
    """Pallas implementation of LinearLevels.forward for NCHW input x."""
    if x.ndim != 4:
        raise ValueError("Input must be 4D tensor.")
    B, C, H, W = x.shape
    rows, hw = B * C, H * W
    dtype = x.dtype
    itemsize = jnp.dtype(dtype).itemsize
    # Sublane granularity by element width (f32: 8, bf16/f16: 16, 8-bit: 32).
    sub = {4: 8, 2: 16, 1: 32}.get(itemsize, 8)

    rows_pad = pl.cdiv(rows, sub) * sub          # pad by at most sub-1 rows
    f32_tmp_bytes = 10 * 4                       # live f32 temporaries per input element

    # Common path: whole hw on the lane axis (lane-dense 2-D output blocks).
    per_elem_2d = 2 * itemsize * (1 + n_levels) + f32_tmp_bytes   # dbl-buffered in+out + temps
    tr_cap = vmem_budget_bytes // max(hw * per_elem_2d, 1)
    use_hw_tiling = (tr_cap < sub) and (hw % 128 == 0) and (hw >= 256)
    # TODO(synk): huge images with H*W not a multiple of 128 cannot be lane-tiled cleanly
    # here and fall back to the 2-D path with the minimum row tile (may exceed VMEM).

    x_flat = x.reshape(rows, hw)
    if rows_pad != rows:
        x_flat = jnp.pad(x_flat, ((0, rows_pad - rows), (0, 0)))

    kernel = functools.partial(_levels_kernel, n_levels=n_levels)

    if not use_hw_tiling:
        tr = _pick_row_tile(rows_pad, sub, tr_cap)
        out_cols = n_levels * hw
        resident = tr * hw * per_elem_2d
        vmem_limit = int(min(max(resident * 7 // 5 + (8 << 20), 16 << 20), 48 << 20))
        out_flat = pl.pallas_call(
            kernel,
            out_shape=jax.ShapeDtypeStruct((rows_pad, out_cols), dtype),
            grid_spec=pltpu.PrefetchScalarGridSpec(
                num_scalar_prefetch=0,
                grid=(rows_pad // tr,),
                in_specs=[pl.BlockSpec((tr, hw), lambda i: (i, 0))],
                out_specs=pl.BlockSpec((tr, out_cols), lambda i: (i, 0)),
            ),
            compiler_params=pltpu.CompilerParams(
                dimension_semantics=("parallel",),
                vmem_limit_bytes=vmem_limit,
            ),
        )(x_flat)
        if rows_pad != rows:
            out_flat = out_flat[:rows]
        return out_flat.reshape(B, C * n_levels, H, W)

    # hw-tiled fallback for large images: 3-D output (rows, n_levels, hw) -- identical
    # memory layout to the 2-D path, but blocked (tr, n_levels, tw) with tw % 128 == 0.
    out_sub = pl.cdiv(n_levels, sub) * sub       # level axis sublane-padded in VMEM
    per_elem_3d = 2 * itemsize + 2 * out_sub * itemsize + f32_tmp_bytes
    m = hw // 128
    tw_cap = vmem_budget_bytes // max(sub * per_elem_3d, 1)
    best = 1
    for d in range(1, m + 1):
        if m % d == 0 and 128 * d <= tw_cap:
            best = d
    tw = 128 * best
    tr = _pick_row_tile(rows_pad, sub, vmem_budget_bytes // max(tw * per_elem_3d, 1))
    resident = tr * tw * per_elem_3d
    vmem_limit = int(min(max(resident * 7 // 5 + (8 << 20), 16 << 20), 48 << 20))
    out3 = pl.pallas_call(
        kernel,
        out_shape=jax.ShapeDtypeStruct((rows_pad, n_levels, hw), dtype),
        grid_spec=pltpu.PrefetchScalarGridSpec(
            num_scalar_prefetch=0,
            grid=(rows_pad // tr, hw // tw),
            in_specs=[pl.BlockSpec((tr, tw), lambda i, j: (i, j))],
            out_specs=pl.BlockSpec((tr, n_levels, tw), lambda i, j: (i, 0, j)),
        ),
        compiler_params=pltpu.CompilerParams(
            dimension_semantics=("parallel", "parallel"),
            vmem_limit_bytes=vmem_limit,
        ),
    )(x_flat)
    if rows_pad != rows:
        out3 = out3[:rows]
    return out3.reshape(B, C * n_levels, H, W)


def _reference(x: jax.Array, n_levels: int = N_LEVELS) -> jax.Array:
    """Pure-JAX reference mirroring _linear_bin_contributions."""
    B, C, H, W = x.shape
    xf = x.astype(jnp.float32)
    centers = jnp.array([(l + 0.5) / n_levels for l in range(n_levels)], dtype=jnp.float32)
    diff = jnp.abs(xf[:, :, None, :, :] - centers[None, None, :, None, None])
    scores = jnp.maximum(1.0 - diff * n_levels, 0.0)
    denom = jnp.maximum(jnp.sum(jnp.abs(scores), axis=2, keepdims=True), _EPS)
    out = (scores / denom).reshape(B, C * n_levels, H, W)
    return out.astype(x.dtype)


if __name__ == "__main__":
    root = jax.random.PRNGKey(0)
    k1, k2, k3, k4 = jax.random.split(root, 4)

    # 1) Main small test (rows = B*C = 8, multiple of the sublane tile -> no pad/slice).
    B, C, H, W = 2, 4, 16, 16
    x = jax.random.uniform(k1, (B, C, H, W), dtype=jnp.float32)
    out = jax.block_until_ready(linear_levels(x, N_LEVELS))
    ref = _reference(x, N_LEVELS)
    assert out.shape == (B, C * N_LEVELS, H, W), out.shape
    assert jnp.allclose(out, ref, atol=1e-5, rtol=1e-5), float(jnp.max(jnp.abs(out - ref)))

    # 2) Unaligned rows (B*C = 9) -> exercises the (<= sub-1 row) zero-padding path.
    x2 = jax.random.uniform(k2, (3, 3, 8, 16), dtype=jnp.float32)
    out2 = jax.block_until_ready(linear_levels(x2, N_LEVELS))
    ref2 = _reference(x2, N_LEVELS)
    assert out2.shape == (3, 3 * N_LEVELS, 8, 16), out2.shape
    assert jnp.allclose(out2, ref2, atol=1e-5, rtol=1e-5), float(jnp.max(jnp.abs(out2 - ref2)))

    # 3) bf16 input (dtype stays bf16 end-to-end; compare in f32 with bf16-ulp tolerance).
    x3 = jax.random.uniform(k3, (2, 4, 16, 16), dtype=jnp.bfloat16)
    out3 = jax.block_until_ready(linear_levels(x3, N_LEVELS))
    ref3 = _reference(x3, N_LEVELS)
    assert out3.dtype == jnp.bfloat16 and out3.shape == (2, 4 * N_LEVELS, 16, 16)
    assert jnp.allclose(out3.astype(jnp.float32), ref3.astype(jnp.float32), atol=1e-2), \
        float(jnp.max(jnp.abs(out3.astype(jnp.float32) - ref3.astype(jnp.float32))))

    # 4) hw-tiled (large-image) fallback path, forced at a small shape via a tiny VMEM budget.
    x4 = jax.random.uniform(k4, (1, 2, 32, 128), dtype=jnp.float32)
    out4 = jax.block_until_ready(linear_levels(x4, N_LEVELS, vmem_budget_bytes=1 << 20))
    ref4 = _reference(x4, N_LEVELS)
    assert out4.shape == (1, 2 * N_LEVELS, 32, 128), out4.shape
    assert jnp.allclose(out4, ref4, atol=1e-5, rtol=1e-5), float(jnp.max(jnp.abs(out4 - ref4)))

    print("KERNEL_OK")
</pallas_src>

<mosaic_0001>
module attributes {stable_mosaic.version = 11 : i64} {
  func.func @_levels_kernel(%arg0: i32, %arg1: memref<8x256xf32, #tpu.memory_space<vmem>>, %arg2: memref<8x1024xf32, #tpu.memory_space<vmem>>) attributes {dimension_semantics = [#tpu.dimension_semantics<parallel>], iteration_bounds = array<i64: 1>, scalar_prefetch = 0 : i64, scratch_operands = 0 : i64, tpu.core_type = #tpu.core_type<tc>, window_params = [{transform_indices = @transform_0, window_bounds = array<i64: 8, 256>}, {transform_indices = @transform_1, window_bounds = array<i64: 8, 1024>}]} {
    %c0 = arith.constant 0 : index
    %c0_0 = arith.constant 0 : index
    %0 = vector.load %arg1[%c0, %c0_0] : memref<8x256xf32, #tpu.memory_space<vmem>>, vector<8x256xf32>
    %cst = arith.constant 4.000000e+00 : f32
    %1 = vector.broadcast %cst : f32 to vector<8x256xf32>
    %2 = arith.mulf %0, %1 : vector<8x256xf32>
    %cst_1 = arith.constant 5.000000e-01 : f32
    %3 = vector.broadcast %cst_1 : f32 to vector<8x256xf32>
    %4 = arith.subf %2, %3 : vector<8x256xf32>
    %5 = math.absf %4 : vector<8x256xf32>
    %cst_2 = arith.constant 1.000000e+00 : f32
    %6 = vector.broadcast %cst_2 : f32 to vector<8x256xf32>
    %7 = arith.subf %6, %5 : vector<8x256xf32>
    %cst_3 = arith.constant 0.000000e+00 : f32
    %8 = vector.broadcast %cst_3 : f32 to vector<8x256xf32>
    %9 = arith.maximumf %7, %8 : vector<8x256xf32>
    %cst_4 = arith.constant 1.500000e+00 : f32
    %10 = vector.broadcast %cst_4 : f32 to vector<8x256xf32>
    %11 = arith.subf %2, %10 : vector<8x256xf32>
    %12 = math.absf %11 : vector<8x256xf32>
    %cst_5 = arith.constant 1.000000e+00 : f32
    %13 = vector.broadcast %cst_5 : f32 to vector<8x256xf32>
    %14 = arith.subf %13, %12 : vector<8x256xf32>
    %cst_6 = arith.constant 0.000000e+00 : f32
    %15 = vector.broadcast %cst_6 : f32 to vector<8x256xf32>
    %16 = arith.maximumf %14, %15 : vector<8x256xf32>
    %cst_7 = arith.constant 2.500000e+00 : f32
    %17 = vector.broadcast %cst_7 : f32 to vector<8x256xf32>
    %18 = arith.subf %2, %17 : vector<8x256xf32>
    %19 = math.absf %18 : vector<8x256xf32>
    %cst_8 = arith.constant 1.000000e+00 : f32
    %20 = vector.broadcast %cst_8 : f32 to vector<8x256xf32>
    %21 = arith.subf %20, %19 : vector<8x256xf32>
    %cst_9 = arith.constant 0.000000e+00 : f32
    %22 = vector.broadcast %cst_9 : f32 to vector<8x256xf32>
    %23 = arith.maximumf %21, %22 : vector<8x256xf32>
    %cst_10 = arith.constant 3.500000e+00 : f32
    %24 = vector.broadcast %cst_10 : f32 to vector<8x256xf32>
    %25 = arith.subf %2, %24 : vector<8x256xf32>
    %26 = math.absf %25 : vector<8x256xf32>
    %cst_11 = arith.constant 1.000000e+00 : f32
    %27 = vector.broadcast %cst_11 : f32 to vector<8x256xf32>
    %28 = arith.subf %27, %26 : vector<8x256xf32>
    %cst_12 = arith.constant 0.000000e+00 : f32
    %29 = vector.broadcast %cst_12 : f32 to vector<8x256xf32>
    %30 = arith.maximumf %28, %29 : vector<8x256xf32>
    %31 = arith.addf %9, %16 : vector<8x256xf32>
    %32 = arith.addf %31, %23 : vector<8x256xf32>
    %33 = arith.addf %32, %30 : vector<8x256xf32>
    %cst_13 = arith.constant 9.99999996E-13 : f32
    %34 = vector.broadcast %cst_13 : f32 to vector<8x256xf32>
    %35 = arith.maximumf %33, %34 : vector<8x256xf32>
    %36 = tpu.reciprocal %35 {approx = true} : vector<8x256xf32> -> vector<8x256xf32>
    %37 = arith.mulf %35, %36 : vector<8x256xf32>
    %cst_14 = arith.constant 2.000000e+00 : f32
    %38 = vector.broadcast %cst_14 : f32 to vector<8x256xf32>
    %39 = arith.subf %38, %37 : vector<8x256xf32>
    %40 = arith.mulf %36, %39 : vector<8x256xf32>
    %41 = arith.mulf %9, %40 : vector<8x256xf32>
    %c0_15 = arith.constant 0 : index
    %c0_16 = arith.constant 0 : index
    %42 = vector.load %arg2[%c0_15, %c0_16] : memref<8x1024xf32, #tpu.memory_space<vmem>>, vector<8x256xf32>
    tpu.vector_store %arg2[%c0_15, %c0_16], %41 {strides = array<i32>} : memref<8x1024xf32, #tpu.memory_space<vmem>>, vector<8x256xf32>,
    %43 = arith.mulf %16, %40 : vector<8x256xf32>
    %c0_17 = arith.constant 0 : index
    %c256 = arith.constant 256 : index
    %44 = vector.load %arg2[%c0_17, %c256] : memref<8x1024xf32, #tpu.memory_space<vmem>>, vector<8x256xf32>
    tpu.vector_store %arg2[%c0_17, %c256], %43 {strides = array<i32>} : memref<8x1024xf32, #tpu.memory_space<vmem>>, vector<8x256xf32>,
    %45 = arith.mulf %23, %40 : vector<8x256xf32>
    %c0_18 = arith.constant 0 : index
    %c512 = arith.constant 512 : index
    %46 = vector.load %arg2[%c0_18, %c512] : memref<8x1024xf32, #tpu.memory_space<vmem>>, vector<8x256xf32>
    tpu.vector_store %arg2[%c0_18, %c512], %45 {strides = array<i32>} : memref<8x1024xf32, #tpu.memory_space<vmem>>, vector<8x256xf32>,
    %47 = arith.mulf %30, %40 : vector<8x256xf32>
    %c0_19 = arith.constant 0 : index
    %c768 = arith.constant 768 : index
    %48 = vector.load %arg2[%c0_19, %c768] : memref<8x1024xf32, #tpu.memory_space<vmem>>, vector<8x256xf32>
    tpu.vector_store %arg2[%c0_19, %c768], %47 {strides = array<i32>} : memref<8x1024xf32, #tpu.memory_space<vmem>>, vector<8x256xf32>,
    return
  }
  func.func @transform_0(%arg0: i32) -> (i32, i32) {
    %c0_i32 = arith.constant 0 : i32
    %c0_i32_0 = arith.constant 0 : i32
    return %arg0, %c0_i32 : i32, i32
  }
  func.func @transform_1(%arg0: i32) -> (i32, i32) {
    %c0_i32 = arith.constant 0 : i32
    %c0_i32_0 = arith.constant 0 : i32
    return %arg0, %c0_i32 : i32, i32
  }
}

</mosaic_0001>

<llo_original>
// kernel: tpu_custom_call.1
$region0: #{tpu_custom_call.1}
  #allocation0 [shape = 'u32[]', space=smem, size = 0x4, offset = 0x4, fixed_abs, tag = 'smem constant byte address 0x4 - core index']
  #allocation1 [shape = 'u32[72,128]{1,0:T(1,128)}', space=vmem, size = 0x9000, scoped, tag = 'internal scratch']
  %s0 = inlined_call_operand.hbm [shape: f32[8,256], index: 0, kind: input, shape index: {}]
  %s1 = inlined_call_operand.hbm [shape: f32[8,1024], index: 1, kind: output, shape index: {}]
  %s2 = sld [smem:[#allocation0]]
  $region18: #{tpu_custom_call.1} parent=0
    _
  %s4 = ssub.s32 1, %s2
  %s5 = scalar_select 0, %s4, %s2
  $region1: #{tpu_custom_call.1} parent=0
    #allocation2 [shape = 'u8[8192]{0}', space=vmem, size = 0x2000, scoped, tag = 'input window, operand 0, single buffered']
    #allocation3 [shape = 's32[1]{0}', space=sflag, size = 0x4, scoped, tag = 'scoped memory for tpu_custom_call.1']
    #allocation4 [shape = 's32[1]{0}', space=sflag, size = 0x4, scoped, tag = 'scoped memory for tpu_custom_call.1']
    #allocation5 [shape = 'u8[32768]{0}', space=vmem, size = 0x8000, scoped, tag = 'output window, operand 0, single buffered']
    %6 = vsyncpa [#allocation3], 0
    %7 = vsyncpa [#allocation4], 0
    // Predicated region
    $region2: #{tpu_custom_call.1} parent=1 // pred_check
      _
    $region3: #{tpu_custom_call.1} parent=1 // pred_check_branch
      %9 = sbr.rel (0) target = $region5
    $region4: #{tpu_custom_call.1} parent=1 // pred_region
      %11 = vsyncadd [#allocation3], 0
      %s13 = sshll.u32 %s0, 4
      %s14 = int_to_ptr.hbm [resolvable:$true] %s13
      %s15 = sshll.u32 [#allocation2], 4
      %s16 = int_to_ptr.vmem [resolvable:$true] %s15
      %18 = dma.hbm_to_vmem [thread:$0]  %s14, 256, %s16, [#allocation3]
    $region5: #{tpu_custom_call.1} parent=1 // pred_fallthru
      _
    // Predicated region
    $region6: #{tpu_custom_call.1} parent=1 // pred_check
      _
    $region7: #{tpu_custom_call.1} parent=1 // pred_check_branch
      %20 = sbr.rel (0) target = $region9
    $region8: #{tpu_custom_call.1} parent=1 // pred_region
      %22 = dma.done [#allocation3], 256
    $region9: #{tpu_custom_call.1} parent=1 // pred_fallthru
      _
    %v23 = vld [vmem:[#allocation2] sm:$0xff]
    %v24 = vld [vmem:[#allocation2 + $0x8] sm:$0xff]
    %v25 = vmul.f32 %v23, 4.0
    %v26 = vmul.f32 %v24, 4.0
    %v27 = vsub.f32 %v25, 0.5
    %v28 = vsub.f32 %v26, 0.5
    %v29 = vand.u32 2147483647, %v27
    %v30 = vand.u32 2147483647, %v28
    %v31 = vsub.f32 1.0, %v29
    %v32 = vsub.f32 1.0, %v30
    %v33 = vmax.f32 %v31, 0.0
    %v34 = vmax.f32 %v32, 0.0
    %v35 = vsub.f32 %v25, 1.5
    %v36 = vsub.f32 %v26, 1.5
    %v37 = vand.u32 2147483647, %v35
    %v38 = vand.u32 2147483647, %v36
    %v39 = vsub.f32 1.0, %v37
    %v40 = vsub.f32 1.0, %v38
    %v41 = vmax.f32 %v39, 0.0
    %v42 = vmax.f32 %v40, 0.0
    %v43 = vsub.f32 %v25, 2.5
    %v44 = vsub.f32 %v26, 2.5
    %v45 = vand.u32 2147483647, %v43
    %v46 = vand.u32 2147483647, %v44
    %v47 = vsub.f32 1.0, %v45
    %v48 = vsub.f32 1.0, %v46
    %v49 = vmax.f32 %v47, 0.0
    %v50 = vmax.f32 %v48, 0.0
    %v51 = vsub.f32 %v25, 3.5
    %v52 = vsub.f32 %v26, 3.5
    %v53 = vand.u32 2147483647, %v51
    %v54 = vand.u32 2147483647, %v52
    %v55 = vsub.f32 1.0, %v53
    %v56 = vsub.f32 1.0, %v54
    %v57 = vmax.f32 %v55, 0.0
    %v58 = vmax.f32 %v56, 0.0
    %v59 = vadd.f32 %v33, %v41
    %v60 = vadd.f32 %v34, %v42
    %v61 = vadd.f32 %v59, %v49
    %v62 = vadd.f32 %v60, %v50
    %v63 = vadd.f32 %v61, %v57
    %v64 = vadd.f32 %v62, %v58
    %v65 = vmax.f32 %v63, 1e-12
    %v66 = vmax.f32 %v64, 1e-12
    %v67 = vrcp.pop %v65
    %v68 = vrcp.pop %v66
    %v69 = vmul.f32 %v65, %v67
    %v70 = vmul.f32 %v66, %v68
    %v71 = vsub.f32 2.0, %v69
    %v72 = vsub.f32 2.0, %v70
    %v73 = vmul.f32 %v67, %v71
    %v74 = vmul.f32 %v68, %v72
    %v75 = vmul.f32 %v33, %v73
    %v76 = vmul.f32 %v34, %v74
    %77 = vst [vmem:[#allocation5] sm:$0xff] %v75
    %78 = vst [vmem:[#allocation5 + $0x8] sm:$0xff] %v76
    %v79 = vmul.f32 %v41, %v73
    %v80 = vmul.f32 %v42, %v74
    %81 = vst [vmem:[#allocation5 + $0x10] sm:$0xff] %v79
    %82 = vst [vmem:[#allocation5 + $0x18] sm:$0xff] %v80
    %v83 = vmul.f32 %v49, %v73
    %v84 = vmul.f32 %v50, %v74
    %85 = vst [vmem:[#allocation5 + $0x20] sm:$0xff] %v83
    %86 = vst [vmem:[#allocation5 + $0x28] sm:$0xff] %v84
    %v87 = vmul.f32 %v57, %v73
    %v88 = vmul.f32 %v58, %v74
    %89 = vst [vmem:[#allocation5 + $0x30] sm:$0xff] %v87
    %90 = vst [vmem:[#allocation5 + $0x38] sm:$0xff] %v88
    // Predicated region
    $region10: #{tpu_custom_call.1} parent=1 // pred_check
      _
    $region11: #{tpu_custom_call.1} parent=1 // pred_check_branch
      %92 = sbr.rel (0) target = $region13
    $region12: #{tpu_custom_call.1} parent=1 // pred_region
      %94 = vsyncadd [#allocation4], 0
      %s96 = sshll.u32 [#allocation5], 4
      %s97 = int_to_ptr.vmem [resolvable:$true] %s96
      %s98 = sshll.u32 %s1, 4
      %s99 = int_to_ptr.hbm [resolvable:$true] %s98
      %101 = dma.vmem_to_hbm [thread:$0]  %s97, 1024, %s99, [#allocation4]
    $region13: #{tpu_custom_call.1} parent=1 // pred_fallthru
      _
    // Predicated region
    $region14: #{tpu_custom_call.1} parent=1 // pred_check
      _
    $region15: #{tpu_custom_call.1} parent=1 // pred_check_branch
      %103 = sbr.rel (0) target = $region17
    $region16: #{tpu_custom_call.1} parent=1 // pred_region
      %105 = dma.done [#allocation4], 1024
    $region17: #{tpu_custom_call.1} parent=1 // pred_fallthru
      _
    %106 = vsyncpa [#allocation3], 1
    %107 = vsyncpa [#allocation4], 1

</llo_original>
